<compile_context>
chip_gen: v5e
topology: v5e:2x2
jax: 0.10.0
libtpu: 0.0.40
codegen_flags: <defaults>
</compile_context>

<pallas_src>
import functools

import jax
import jax.numpy as jnp
from jax.experimental import pallas as pl
from jax.experimental.pallas import tpu as pltpu


# ----------------------------------------------------------------------------
# Kernel
# ----------------------------------------------------------------------------
def _graph_nonlocal_kernel(x_ref, wproj_ref, bproj_ref, mask_ref, w2_ref,
                           ww_ref, shift_ref, o_ref, *, ci, group, use_bf16):
    """One block of block_b batch elements, rows already in grouped joint order.

    x_ref:     (M, C)        f32 input rows (M = block_b * J)
    wproj_ref: (C, 2*Ci+1)   fused [phi | g | theta@w1] projection weight
    bproj_ref: (1, 2*Ci+1)   fused projection bias
    mask_ref:  (M, bns)      block-diagonal batch mask with 1/Ns folded in
    w2_ref:    (1, Ci)       concat_project "phi" half
    ww_ref:    (Ci, C)       W conv weight with BN scale folded
    shift_ref: (1, C)        W bias*scale + BN shift
    """
    x = x_ref[...]                                     # (M, C) f32
    mm_dtype = jnp.bfloat16 if use_bf16 else x.dtype
    m = x.shape[0]
    bns = m // group                                   # pooled positions in block

    # Fused theta/phi/g 1x1-conv projections in ONE MXU pass (bf16 operands,
    # f32 accumulation).  Columns: [ phi (Ci) | g (Ci) | theta @ w1 (1) ].
    proj = jnp.dot(x.astype(mm_dtype), wproj_ref[...],
                   preferred_element_type=jnp.float32) + bproj_ref[...]
    pg = proj[:, :2 * ci]                              # (M, 2*Ci)
    a = proj[:, 2 * ci:2 * ci + 1]                     # (M, 1)  = theta @ w1

    # MaxPool1d(kernel=group, stride=group): groups are contiguous rows because
    # grouped_order was applied in the wrapper.
    pooled = jnp.max(pg.reshape(bns, group, 2 * ci), axis=1)    # (bns, 2*Ci)
    phi_p = pooled[:, :ci]                                       # (bns, Ci)
    g_p = pooled[:, ci:]                                         # (bns, Ci)

    # concat_project + ReLU (separable): f[i, n] = relu(a_i + <w2, phi_p_n>).
    # mask_ref zeroes cross-batch pairs and carries the 1/Ns scale, so ONE 2-D
    # matmul performs every per-batch attention in this block.
    bvec = jnp.sum(phi_p * w2_ref[...], axis=-1, keepdims=True)  # (bns, 1)
    f = jnp.maximum(a + bvec.T, 0.0) * mask_ref[...]             # (M, bns)

    # y = f_div_C @ g_x, then W (1x1 conv, eval-mode BN folded) + residual.
    y = jnp.dot(f.astype(mm_dtype), g_p.astype(mm_dtype),
                preferred_element_type=jnp.float32)              # (M, Ci)
    z = jnp.dot(y.astype(mm_dtype), ww_ref[...],
                preferred_element_type=jnp.float32) + shift_ref[...] + x
    o_ref[...] = z.astype(o_ref.dtype)


# ----------------------------------------------------------------------------
# Wrapper
# ----------------------------------------------------------------------------
def _pick_block_b(B, J, group):
    """Generation-aware batch blocking.

    v5e / v6e: single TensorCore -> the grid is a serial loop, so collapse to
    as few, tall blocks as possible (M up to ~512 rows, bns <= 128).
    v7x: two TensorCores -> keep >= 2 parallel grid steps when B allows.
    """
    ns = max(1, J // group)
    bb = max(1, min(B, max(1, 512 // max(J, 1)), max(1, 128 // ns)))
    try:
        kind = jax.devices()[0].device_kind.lower()
    except Exception:
        kind = ""
    if ("v7" in kind or "7x" in kind) and B >= 2:
        bb = min(bb, max(1, (B + 1) // 2))
    # Rows per block must be a multiple of 8 (sublane tiling); batch padding in
    # the wrapper absorbs any overshoot.
    while (bb * J) % 8:
        bb += 1
    return bb


def graph_nonlocal_forward(x, params, grouped_order, restored_order, group_size,
                           block_b=None, use_bf16=True):
    """Pallas implementation of _GraphNonLocal.forward. x: (B, J, C) float32."""
    B, J, C = x.shape
    Ci = C // 2
    Ns = J // group_size
    (wt, bt, wp, bp, wg, bg, w1, w2, ww, bw, bn_scale, bn_shift) = params

    # ---- trace-time parameter fusion (tiny arrays, plain XLA glue) ----------
    w_proj = jnp.concatenate([wp, wg, wt @ w1], axis=1)      # (C, 2*Ci + 1)
    b_proj = jnp.concatenate([bp, bg, bt @ w1], axis=1)      # (1, 2*Ci + 1)
    w2_row = w2.reshape(1, Ci)
    ww_f = ww * bn_scale                                     # BN scale folded into W
    shift_f = bw * bn_scale + bn_shift                       # W bias + BN shift
    mm_dtype = jnp.bfloat16 if use_bf16 else x.dtype
    w_proj = w_proj.astype(mm_dtype)                         # bf16 MXU operands
    ww_f = ww_f.astype(mm_dtype)

    # ---- joint permutation OUTSIDE the kernel (plain XLA gather) ------------
    xg = jnp.take(x, grouped_order, axis=1)                  # (B, J, C) grouped

    # ---- batch blocking ------------------------------------------------------
    if block_b is None:
        block_b = _pick_block_b(B, J, group_size)
    M = block_b * J
    assert M % 8 == 0, "block_b * J must be a multiple of 8 (sublane tiling)"
    n_blocks = pl.cdiv(B, block_b)
    B_pad = n_blocks * block_b
    if B_pad != B:
        xg = jnp.pad(xg, ((0, B_pad - B), (0, 0), (0, 0)))
    xs = xg.reshape(B_pad * J, C)

    # ---- grid-invariant block-diagonal batch mask (1/Ns scale folded) -------
    bns = block_b * Ns
    row_b = jnp.arange(M, dtype=jnp.int32)[:, None] // J
    col_b = jnp.arange(bns, dtype=jnp.int32)[None, :] // Ns
    mask = (row_b == col_b).astype(jnp.float32) * (1.0 / Ns)   # (M, bns)

    const = lambda i: (0, 0)
    in_specs = [
        pl.BlockSpec((M, C), lambda i: (i, 0)),       # x rows for this block
        pl.BlockSpec((C, 2 * Ci + 1), const),         # fused projection weight
        pl.BlockSpec((1, 2 * Ci + 1), const),         # fused projection bias
        pl.BlockSpec((M, bns), const),                # block-diag mask (*1/Ns)
        pl.BlockSpec((1, Ci), const),                 # concat_project phi half
        pl.BlockSpec((Ci, C), const),                 # W conv weight (* BN scale)
        pl.BlockSpec((1, C), const),                  # W bias*scale + BN shift
    ]
    kernel = functools.partial(_graph_nonlocal_kernel, ci=Ci, group=group_size,
                               use_bf16=use_bf16)

    # Advisory cost estimate so XLA schedules the surrounding gather/pad glue
    # around (not serialized with) the custom call.
    flops = n_blocks * (2 * M * C * (2 * Ci + 1)      # fused projections
                        + 2 * M * bns * Ci            # attention y = f @ g
                        + 2 * M * Ci * C              # W conv
                        + 4 * M * bns)                # relu + mask
    param_bytes = sum(int(a.size) * a.dtype.itemsize
                      for a in (w_proj, b_proj, mask, w2_row, ww_f, shift_f))
    bytes_io = n_blocks * 2 * M * C * x.dtype.itemsize + param_bytes
    cost = pl.CostEstimate(flops=flops, transcendentals=0,
                           bytes_accessed=bytes_io)

    out = pl.pallas_call(
        kernel,
        out_shape=jax.ShapeDtypeStruct((B_pad * J, C), x.dtype),
        grid=(n_blocks,),
        in_specs=in_specs,
        out_specs=pl.BlockSpec((M, C), lambda i: (i, 0)),
        compiler_params=pltpu.CompilerParams(dimension_semantics=("parallel",)),
        cost_estimate=cost,
    )(xs, w_proj, b_proj, mask, w2_row, ww_f, shift_f)

    # Restored joint order applied OUTSIDE the kernel (plain XLA gather).
    z = out[:B * J].reshape(B, J, C)
    return jnp.take(z, restored_order, axis=1)


# ----------------------------------------------------------------------------
# Pure-JAX reference (mirrors the PyTorch forward, eval-mode BN)
# ----------------------------------------------------------------------------
def reference_forward(x, params, grouped_order, restored_order, group_size):
    B, J, C = x.shape
    Ci = C // 2
    Ns = J // group_size
    (wt, bt, wp, bp, wg, bg, w1, w2, ww, bw, bn_scale, bn_shift) = params

    xg = x[:, grouped_order, :]
    theta = xg @ wt + bt                                         # (B, J, Ci)
    phi = xg @ wp + bp                                           # (B, J, Ci)
    gf = xg @ wg + bg                                            # (B, J, Ci)
    phi_p = jnp.max(phi.reshape(B, Ns, group_size, Ci), axis=2)  # (B, Ns, Ci)
    g_p = jnp.max(gf.reshape(B, Ns, group_size, Ci), axis=2)     # (B, Ns, Ci)
    a = theta @ w1                                               # (B, J, 1)
    bvec = phi_p @ w2                                            # (B, Ns, 1)
    f = jax.nn.relu(a + jnp.swapaxes(bvec, 1, 2)) / Ns           # (B, J, Ns)
    y = f @ g_p                                                  # (B, J, Ci)
    wy = y @ ww + bw                                             # (B, J, C)
    z = wy * bn_scale + bn_shift + xg
    return z[:, restored_order, :]


def init_params(key, C):
    """Deterministic parameter init (shapes follow _NonLocalBlock.__init__, dim=1)."""
    Ci = C // 2
    ks = jax.random.split(key, 8)

    def kaiming(k, shape, fan_in):
        return jax.random.normal(k, shape, jnp.float32) * jnp.sqrt(2.0 / fan_in)

    wt = kaiming(ks[0], (C, Ci), C)          # theta: Conv1d(C, Ci, 1) weight^T
    wp = kaiming(ks[1], (C, Ci), C)          # phi
    wg = kaiming(ks[2], (C, Ci), C)          # g
    bt = jnp.zeros((1, Ci), jnp.float32)
    bp = jnp.zeros((1, Ci), jnp.float32)
    bg = jnp.zeros((1, Ci), jnp.float32)
    # concat_project: Conv2d(2*Ci, 1, 1, bias=False) split into theta/phi halves.
    wcp = kaiming(ks[3], (2 * Ci,), 2 * Ci)
    w1 = wcp[:Ci].reshape(Ci, 1)
    w2 = wcp[Ci:].reshape(Ci, 1)
    # W: Conv1d(Ci, C, 1) + BatchNorm1d(C).
    ww = kaiming(ks[4], (Ci, C), Ci)
    bw = jnp.zeros((1, C), jnp.float32)
    # BatchNorm1d, eval-mode affine (running_mean=0, running_var=1).  PyTorch
    # init sets gamma=0 (identity block); use nonzero gamma so the kernel's
    # compute path is actually exercised.
    # TODO(synk): training-mode BatchNorm (batch statistics over B*J) not
    #             implemented; only eval-mode affine is supported.
    eps = 1e-5
    gamma = 0.5 + 0.1 * jax.random.normal(ks[5], (1, C), jnp.float32)
    beta = 0.1 * jax.random.normal(ks[6], (1, C), jnp.float32)
    running_mean = jnp.zeros((1, C), jnp.float32)
    running_var = jnp.ones((1, C), jnp.float32)
    bn_scale = gamma / jnp.sqrt(running_var + eps)
    bn_shift = beta - running_mean * bn_scale

    return (wt, bt, wp, bp, wg, bg, w1, w2, ww, bw, bn_scale, bn_shift)


if __name__ == "__main__":
    key = jax.random.PRNGKey(0)
    k_x, k_perm, k_par = jax.random.split(key, 3)

    B, J, C, GROUP = 2, 16, 32, 4          # batch, joints, hid_dim, group_size
    assert J % GROUP == 0

    x = jax.random.normal(k_x, (B, J, C), jnp.float32)
    grouped_order = jax.random.permutation(k_perm, J)
    restored_order = jnp.argsort(grouped_order)   # inverse permutation
    params = init_params(k_par, C)

    ref = reference_forward(x, params, grouped_order, restored_order, GROUP)

    # Exact-math check: f32 MXU operands, tight tolerance.
    out_f32 = jax.block_until_ready(
        graph_nonlocal_forward(x, params, grouped_order, restored_order, GROUP,
                               use_bf16=False))
    assert out_f32.shape == (B, J, C)
    assert jnp.allclose(out_f32, ref, atol=1e-4, rtol=1e-4), "mismatch (f32 path)"

    # Fast path: bf16 MXU operands with f32 accumulation (default).
    out_bf16 = jax.block_until_ready(
        graph_nonlocal_forward(x, params, grouped_order, restored_order, GROUP))
    assert jnp.allclose(out_bf16, ref, atol=1e-1, rtol=1e-1), "mismatch (bf16 path)"

    # General (non-inverse) restored_order: just a different output gather.
    restored_alt = jnp.roll(restored_order, 3)
    ref_alt = reference_forward(x, params, grouped_order, restored_alt, GROUP)
    out_alt = jax.block_until_ready(
        graph_nonlocal_forward(x, params, grouped_order, restored_alt, GROUP,
                               use_bf16=False))
    assert jnp.allclose(out_alt, ref_alt, atol=1e-4, rtol=1e-4), \
        "mismatch (general restore)"

    print("KERNEL_OK")
</pallas_src>

<mosaic_0001>
module attributes {stable_mosaic.version = 11 : i64} {
  func.func @_graph_nonlocal_kernel(%arg0: i32, %arg1: memref<32x32xf32, #tpu.memory_space<vmem>>, %arg2: memref<32x33xf32, #tpu.memory_space<vmem>>, %arg3: memref<1x33xf32, #tpu.memory_space<vmem>>, %arg4: memref<32x8xf32, #tpu.memory_space<vmem>>, %arg5: memref<1x16xf32, #tpu.memory_space<vmem>>, %arg6: memref<16x32xf32, #tpu.memory_space<vmem>>, %arg7: memref<1x32xf32, #tpu.memory_space<vmem>>, %arg8: memref<32x32xf32, #tpu.memory_space<vmem>>) attributes {dimension_semantics = [#tpu.dimension_semantics<parallel>], iteration_bounds = array<i64: 1>, scalar_prefetch = 0 : i64, scratch_operands = 0 : i64, tpu.core_type = #tpu.core_type<tc>, window_params = [{transform_indices = @transform_0, window_bounds = array<i64: 32, 32>}, {pipeline_mode = #tpu.pipeline_mode<synchronous>, transform_indices = @transform_1, window_bounds = array<i64: 32, 33>}, {pipeline_mode = #tpu.pipeline_mode<synchronous>, transform_indices = @transform_2, window_bounds = array<i64: 1, 33>}, {pipeline_mode = #tpu.pipeline_mode<synchronous>, transform_indices = @transform_3, window_bounds = array<i64: 32, 8>}, {pipeline_mode = #tpu.pipeline_mode<synchronous>, transform_indices = @transform_4, window_bounds = array<i64: 1, 16>}, {pipeline_mode = #tpu.pipeline_mode<synchronous>, transform_indices = @transform_5, window_bounds = array<i64: 16, 32>}, {pipeline_mode = #tpu.pipeline_mode<synchronous>, transform_indices = @transform_6, window_bounds = array<i64: 1, 32>}, {transform_indices = @transform_7, window_bounds = array<i64: 32, 32>}]} {
    %c0 = arith.constant 0 : index
    %c0_0 = arith.constant 0 : index
    %0 = vector.load %arg1[%c0, %c0_0] : memref<32x32xf32, #tpu.memory_space<vmem>>, vector<32x32xf32>
    %c0_1 = arith.constant 0 : index
    %c0_2 = arith.constant 0 : index
    %1 = vector.load %arg2[%c0_1, %c0_2] : memref<32x33xf32, #tpu.memory_space<vmem>>, vector<32x33xf32>
    %cst = arith.constant dense<0.000000e+00> : vector<32x33xf32>
    %2 = tpu.matmul %0, %1, %cst {dimension_numbers = #tpu.dot_dimension_numbers<[1], [0], [0], [1], [0, 0, 1, 1], [], []>} : vector<32x32xf32>, vector<32x33xf32>, vector<32x33xf32> -> vector<32x33xf32>
    %c0_3 = arith.constant 0 : index
    %c0_4 = arith.constant 0 : index
    %3 = vector.load %arg3[%c0_3, %c0_4] : memref<1x33xf32, #tpu.memory_space<vmem>>, vector<1x33xf32>
    %4 = vector.broadcast %3 : vector<1x33xf32> to vector<32x33xf32>
    %5 = arith.addf %2, %4 : vector<32x33xf32>
    %6 = vector.extract_strided_slice %5 {offsets = [0, 0], sizes = [32, 32], strides = [1, 1]} : vector<32x33xf32> to vector<32x32xf32>
    %7 = vector.extract_strided_slice %5 {offsets = [0, 32], sizes = [32, 1], strides = [1, 1]} : vector<32x33xf32> to vector<32x1xf32>
    %8 = vector.shape_cast %6 : vector<32x32xf32> to vector<8x4x32xf32>
    %cst_5 = arith.constant dense<0xFF800000> : vector<8x32xf32>
    %9 = vector.multi_reduction <maximumf>, %8, %cst_5 [1] : vector<8x4x32xf32> to vector<8x32xf32>
    %10 = vector.extract_strided_slice %9 {offsets = [0, 0], sizes = [8, 16], strides = [1, 1]} : vector<8x32xf32> to vector<8x16xf32>
    %11 = vector.extract_strided_slice %9 {offsets = [0, 16], sizes = [8, 16], strides = [1, 1]} : vector<8x32xf32> to vector<8x16xf32>
    %c0_6 = arith.constant 0 : index
    %c0_7 = arith.constant 0 : index
    %12 = vector.load %arg5[%c0_6, %c0_7] : memref<1x16xf32, #tpu.memory_space<vmem>>, vector<1x16xf32>
    %13 = vector.broadcast %12 : vector<1x16xf32> to vector<8x16xf32>
    %14 = arith.mulf %10, %13 : vector<8x16xf32>
    %cst_8 = arith.constant dense<0.000000e+00> : vector<8xf32>
    %15 = vector.multi_reduction <add>, %14, %cst_8 [1] : vector<8x16xf32> to vector<8xf32>
    %16 = vector.shape_cast %15 : vector<8xf32> to vector<8x1xf32>
    %17 = tpu.transpose %16, [1, 0] : vector<8x1xf32> -> vector<1x8xf32>
    %18 = vector.broadcast %7 : vector<32x1xf32> to vector<32x8xf32>
    %19 = vector.broadcast %17 : vector<1x8xf32> to vector<32x8xf32>
    %20 = arith.addf %18, %19 : vector<32x8xf32>
    %cst_9 = arith.constant 0.000000e+00 : f32
    %21 = vector.broadcast %cst_9 : f32 to vector<32x8xf32>
    %22 = arith.maximumf %20, %21 : vector<32x8xf32>
    %c0_10 = arith.constant 0 : index
    %c0_11 = arith.constant 0 : index
    %23 = vector.load %arg4[%c0_10, %c0_11] : memref<32x8xf32, #tpu.memory_space<vmem>>, vector<32x8xf32>
    %24 = arith.mulf %22, %23 : vector<32x8xf32>
    %cst_12 = arith.constant dense<0.000000e+00> : vector<32x16xf32>
    %25 = tpu.matmul %24, %11, %cst_12 {dimension_numbers = #tpu.dot_dimension_numbers<[1], [0], [0], [1], [0, 0, 1, 1], [], []>} : vector<32x8xf32>, vector<8x16xf32>, vector<32x16xf32> -> vector<32x16xf32>
    %c0_13 = arith.constant 0 : index
    %c0_14 = arith.constant 0 : index
    %26 = vector.load %arg6[%c0_13, %c0_14] : memref<16x32xf32, #tpu.memory_space<vmem>>, vector<16x32xf32>
    %cst_15 = arith.constant dense<0.000000e+00> : vector<32x32xf32>
    %27 = tpu.matmul %25, %26, %cst_15 {dimension_numbers = #tpu.dot_dimension_numbers<[1], [0], [0], [1], [0, 0, 1, 1], [], []>} : vector<32x16xf32>, vector<16x32xf32>, vector<32x32xf32> -> vector<32x32xf32>
    %c0_16 = arith.constant 0 : index
    %c0_17 = arith.constant 0 : index
    %28 = vector.load %arg7[%c0_16, %c0_17] : memref<1x32xf32, #tpu.memory_space<vmem>>, vector<1x32xf32>
    %29 = vector.broadcast %28 : vector<1x32xf32> to vector<32x32xf32>
    %30 = arith.addf %27, %29 : vector<32x32xf32>
    %31 = arith.addf %30, %0 : vector<32x32xf32>
    %c0_18 = arith.constant 0 : index
    %c0_19 = arith.constant 0 : index
    %32 = vector.load %arg8[%c0_18, %c0_19] : memref<32x32xf32, #tpu.memory_space<vmem>>, vector<32x32xf32>
    tpu.vector_store %arg8[%c0_18, %c0_19], %31 {strides = array<i32>} : memref<32x32xf32, #tpu.memory_space<vmem>>, vector<32x32xf32>,
    return
  }
  func.func @transform_0(%arg0: i32) -> (i32, i32) {
    %c0_i32 = arith.constant 0 : i32
    %c0_i32_0 = arith.constant 0 : i32
    return %arg0, %c0_i32 : i32, i32
  }
  func.func @transform_1(%arg0: i32) -> (i32, i32) {
    %c0_i32 = arith.constant 0 : i32
    %c0_i32_0 = arith.constant 0 : i32
    %c0_i32_1 = arith.constant 0 : i32
    return %c0_i32, %c0_i32_0 : i32, i32
  }
  func.func @transform_2(%arg0: i32) -> (i32, i32) {
    %c0_i32 = arith.constant 0 : i32
    %c0_i32_0 = arith.constant 0 : i32
    %c0_i32_1 = arith.constant 0 : i32
    return %c0_i32, %c0_i32_0 : i32, i32
  }
  func.func @transform_3(%arg0: i32) -> (i32, i32) {
    %c0_i32 = arith.constant 0 : i32
    %c0_i32_0 = arith.constant 0 : i32
    %c0_i32_1 = arith.constant 0 : i32
    return %c0_i32, %c0_i32_0 : i32, i32
  }
  func.func @transform_4(%arg0: i32) -> (i32, i32) {
    %c0_i32 = arith.constant 0 : i32
    %c0_i32_0 = arith.constant 0 : i32
    %c0_i32_1 = arith.constant 0 : i32
    return %c0_i32, %c0_i32_0 : i32, i32
  }
  func.func @transform_5(%arg0: i32) -> (i32, i32) {
    %c0_i32 = arith.constant 0 : i32
    %c0_i32_0 = arith.constant 0 : i32
    %c0_i32_1 = arith.constant 0 : i32
    return %c0_i32, %c0_i32_0 : i32, i32
  }
  func.func @transform_6(%arg0: i32) -> (i32, i32) {
    %c0_i32 = arith.constant 0 : i32
    %c0_i32_0 = arith.constant 0 : i32
    %c0_i32_1 = arith.constant 0 : i32
    return %c0_i32, %c0_i32_0 : i32, i32
  }
  func.func @transform_7(%arg0: i32) -> (i32, i32) {
    %c0_i32 = arith.constant 0 : i32
    %c0_i32_0 = arith.constant 0 : i32
    return %arg0, %c0_i32 : i32, i32
  }
}

</mosaic_0001>

<llo_original>
// kernel: tpu_custom_call.1
$region0: #{tpu_custom_call.1}
  #allocation0 [shape = 'u32[]', space=smem, size = 0x4, offset = 0x4, fixed_abs, tag = 'smem constant byte address 0x4 - core index']
  #allocation1 [shape = 'u32[72,128]{1,0:T(1,128)}', space=vmem, size = 0x9000, scoped, tag = 'internal scratch']
  %s0 = inlined_call_operand.vmem [shape: f32[32,32], index: 0, kind: input, shape index: {}]
  %s1 = inlined_call_operand.hbm [shape: f32[32,33], index: 1, kind: input, shape index: {}]
  %s2 = inlined_call_operand.vmem [shape: f32[1,33], index: 2, kind: input, shape index: {}]
  %s3 = inlined_call_operand.vmem [shape: f32[32,8], index: 3, kind: input, shape index: {}]
  %s4 = inlined_call_operand.vmem [shape: f32[1,16], index: 4, kind: input, shape index: {}]
  %s5 = inlined_call_operand.hbm [shape: f32[16,32], index: 5, kind: input, shape index: {}]
  %s6 = inlined_call_operand.vmem [shape: f32[1,32], index: 6, kind: input, shape index: {}]
  %s7 = inlined_call_operand.hbm [shape: f32[32,32], index: 7, kind: output, shape index: {}]
  %s8 = sld [smem:[#allocation0]]
  $region46: #{tpu_custom_call.1} parent=0
    _
  %s10 = ssub.s32 1, %s8
  %s11 = scalar_select 0, %s10, %s8
  $region1: #{tpu_custom_call.1} parent=0
    #allocation2 [shape = 'u8[16384]{0}', space=vmem, size = 0x4000, scoped, tag = 'input window, operand 1, single buffered']
    #allocation3 [shape = 's32[1]{0}', space=sflag, size = 0x4, scoped, tag = 'scoped memory for tpu_custom_call.1']
    #allocation4 [shape = 's32[1]{0}', space=sflag, size = 0x4, scoped, tag = 'scoped memory for tpu_custom_call.1']
    #allocation5 [shape = 'u8[8192]{0}', space=vmem, size = 0x2000, scoped, tag = 'input window, operand 5, single buffered']
    #allocation6 [shape = 's32[1]{0}', space=sflag, size = 0x4, scoped, tag = 'scoped memory for tpu_custom_call.1']
    #allocation7 [shape = 'u8[16384]{0}', space=vmem, size = 0x4000, scoped, tag = 'output window, operand 0, single buffered']
    %12 = vsyncpa [#allocation3], 0
    %13 = vsyncpa [#allocation6], 0
    %14 = vsyncpa [#allocation4], 0
    // Predicated region
    $region2: #{tpu_custom_call.1} parent=1 // pred_check
      _
    $region3: #{tpu_custom_call.1} parent=1 // pred_check_branch
      %16 = sbr.rel (0) target = $region5
    $region4: #{tpu_custom_call.1} parent=1 // pred_region
      _
    $region5: #{tpu_custom_call.1} parent=1 // pred_fallthru
      _
    // Predicated region
    $region6: #{tpu_custom_call.1} parent=1 // pred_check
      _
    $region7: #{tpu_custom_call.1} parent=1 // pred_check_branch
      %18 = sbr.rel (0) target = $region9
    $region8: #{tpu_custom_call.1} parent=1 // pred_region
      %20 = vsyncadd [#allocation3], 0
      %s21 = sshll.u32 %s1, 4
      %s22 = int_to_ptr.hbm [resolvable:$true] %s21
      %s23 = sshll.u32 [#allocation2], 4
      %s24 = int_to_ptr.vmem [resolvable:$true] %s23
      %29 = dma.hbm_to_vmem [thread:$0]  %s22, 512, %s24, [#allocation3], 128, 128, 8
    $region9: #{tpu_custom_call.1} parent=1 // pred_fallthru
      _
    // Predicated region
    $region10: #{tpu_custom_call.1} parent=1 // pred_check
      _
    $region11: #{tpu_custom_call.1} parent=1 // pred_check_branch
      %31 = sbr.rel (0) target = $region13
    $region12: #{tpu_custom_call.1} parent=1 // pred_region
      _
    $region13: #{tpu_custom_call.1} parent=1 // pred_fallthru
      _
    // Predicated region
    $region14: #{tpu_custom_call.1} parent=1 // pred_check
      _
    $region15: #{tpu_custom_call.1} parent=1 // pred_check_branch
      %33 = sbr.rel (0) target = $region17
    $region16: #{tpu_custom_call.1} parent=1 // pred_region
      _
    $region17: #{tpu_custom_call.1} parent=1 // pred_fallthru
      _
    // Predicated region
    $region18: #{tpu_custom_call.1} parent=1 // pred_check
      _
    $region19: #{tpu_custom_call.1} parent=1 // pred_check_branch
      %35 = sbr.rel (0) target = $region21
    $region20: #{tpu_custom_call.1} parent=1 // pred_region
      _
    $region21: #{tpu_custom_call.1} parent=1 // pred_fallthru
      _
    // Predicated region
    $region22: #{tpu_custom_call.1} parent=1 // pred_check
      _
    $region23: #{tpu_custom_call.1} parent=1 // pred_check_branch
      %37 = sbr.rel (0) target = $region25
    $region24: #{tpu_custom_call.1} parent=1 // pred_region
      %39 = vsyncadd [#allocation6], 0
      %s40 = sshll.u32 %s5, 4
      %s41 = int_to_ptr.hbm [resolvable:$true] %s40
      %s42 = sshll.u32 [#allocation5], 4
      %s43 = int_to_ptr.vmem [resolvable:$true] %s42
      %48 = dma.hbm_to_vmem [thread:$0]  %s41, 256, %s43, [#allocation6], 128, 128, 8
    $region25: #{tpu_custom_call.1} parent=1 // pred_fallthru
      _
    // Predicated region
    $region26: #{tpu_custom_call.1} parent=1 // pred_check
      _
    $region27: #{tpu_custom_call.1} parent=1 // pred_check_branch
      %50 = sbr.rel (0) target = $region29
    $region28: #{tpu_custom_call.1} parent=1 // pred_region
      _
    $region29: #{tpu_custom_call.1} parent=1 // pred_fallthru
      _
    // Predicated region
    $region30: #{tpu_custom_call.1} parent=1 // pred_check
      _
    $region31: #{tpu_custom_call.1} parent=1 // pred_check_branch
      %52 = sbr.rel (0) target = $region33
    $region32: #{tpu_custom_call.1} parent=1 // pred_region
      %54 = dma.done [#allocation3], 512
    $region33: #{tpu_custom_call.1} parent=1 // pred_fallthru
      _
    // Predicated region
    $region34: #{tpu_custom_call.1} parent=1 // pred_check
      _
    $region35: #{tpu_custom_call.1} parent=1 // pred_check_branch
      %56 = sbr.rel (0) target = $region37
    $region36: #{tpu_custom_call.1} parent=1 // pred_region
      %58 = dma.done [#allocation6], 256
    $region37: #{tpu_custom_call.1} parent=1 // pred_fallthru
      _
    %v59 = vld [vmem:[%s0] sm:$0xff]
    %v60 = vld [vmem:[%s0 + $0x8] sm:$0xff]
    %v61 = vld [vmem:[%s0 + $0x10] sm:$0xff]
    %v62 = vld [vmem:[%s0 + $0x18] sm:$0xff]
    %v63 = vld [vmem:[#allocation2] sm:$0xff]
    %v64 = vld [vmem:[#allocation2 + $0x8] sm:$0xff]
    %v65 = vld [vmem:[#allocation2 + $0x10] sm:$0xff]
    %v66 = vld [vmem:[#allocation2 + $0x18] sm:$0xff]
    %v67 = vld [vmem:[%s2] sm:$0x1]
    %v69 = vperm.slane %v67, 0
    %vm71 = vcmask 261120
    %v73 = vsel %vm71, %v59, 0
    %v76 = vsel %vm71, %v60, 0
    %v79 = vsel %vm71, %v61, 0
    %v82 = vsel %vm71, %v62, 0
    %84 = vmatpush.msra.mxu0 0.0
    %85 = vmatpush.msra.mxu0 0.0
    %86 = vmatpush.msra.mxu0 0.0
    %87 = vmatpush.msra.mxu0 0.0
    %88 = vmatpush.msra.mxu0 0.0
    %89 = vmatpush.msra.mxu0 0.0
    %90 = vmatpush.msra.mxu0 0.0
    %91 = vmatpush.msra.mxu0 0.0
    %92 = vmatpush.msra.mxu0 0.0
    %93 = vmatpush.msra.mxu0 0.0
    %94 = vmatpush.msra.mxu0 0.0
    %95 = vmatpush.msra.mxu0 0.0
    %96 = vmatpush.msra.mxu0 %v66
    %97 = vmatpush.msra.mxu0 %v65
    %98 = vmatpush.msra.mxu0 %v64
    %99 = vmatpush.msra.mxu0 %v63
    %100 = vmatmul.f32.gmra.mxu0 %v73
    %v101 = vpop.f32.mrf.mxu0
    %v102 = vadd.f32 %v69, %v101
    %103 = vmatmul.f32.gmra.mxu0 %v76
    %v104 = vpop.f32.mrf.mxu0
    %v105 = vadd.f32 %v69, %v104
    %106 = vmatmul.f32.gmra.mxu0 %v79
    %v107 = vpop.f32.mrf.mxu0
    %v108 = vadd.f32 %v69, %v107
    %109 = vmatmul.f32.gmra.mxu0 %v82
    %v110 = vpop.f32.mrf.mxu0
    %v111 = vadd.f32 %v69, %v110
    %112 = vdwg.mxu0
    %v117 = vrot.slane %v102, 4
    %v118 = vrot.slane %v105, 4
    %v119 = vrot.slane %v108, 4
    %v120 = vrot.slane %v111, 4
    %vm125 = vcmask 257024
    %v126 = vsel %vm125, %v102, -inf
    %v127 = vrot.slane %v126, 4
    %v128 = vmax.f32 %v126, %v127
    %v129 = vrot.slane %v128, 2
    %v130 = vmax.f32 %v128, %v129
    %v131 = vrot.slane %v130, 1
    %v132 = vmax.f32 %v130, %v131
    %v133 = vsel %vm125, %v117, -inf
    %v134 = vrot.slane %v133, 4
    %v135 = vmax.f32 %v133, %v134
    %v136 = vrot.slane %v135, 2
    %v137 = vmax.f32 %v135, %v136
    %v138 = vrot.slane %v137, 1
    %v139 = vmax.f32 %v137, %v138
    %v140 = vsel %vm125, %v105, -inf
    %v141 = vrot.slane %v140, 4
    %v142 = vmax.f32 %v140, %v141
    %v143 = vrot.slane %v142, 2
    %v144 = vmax.f32 %v142, %v143
    %v145 = vrot.slane %v144, 1
    %v146 = vmax.f32 %v144, %v145
    %v147 = vsel %vm125, %v118, -inf
    %v148 = vrot.slane %v147, 4
    %v149 = vmax.f32 %v147, %v148
    %v150 = vrot.slane %v149, 2
    %v151 = vmax.f32 %v149, %v150
    %v152 = vrot.slane %v151, 1
    %v153 = vmax.f32 %v151, %v152
    %v154 = vsel %vm125, %v108, -inf
    %v155 = vrot.slane %v154, 4
    %v156 = vmax.f32 %v154, %v155
    %v157 = vrot.slane %v156, 2
    %v158 = vmax.f32 %v156, %v157
    %v159 = vrot.slane %v158, 1
    %v160 = vmax.f32 %v158, %v159
    %v161 = vsel %vm125, %v119, -inf
    %v162 = vrot.slane %v161, 4
    %v163 = vmax.f32 %v161, %v162
    %v164 = vrot.slane %v163, 2
    %v165 = vmax.f32 %v163, %v164
    %v166 = vrot.slane %v165, 1
    %v167 = vmax.f32 %v165, %v166
    %v168 = vsel %vm125, %v111, -inf
    %v169 = vrot.slane %v168, 4
    %v170 = vmax.f32 %v168, %v169
    %v171 = vrot.slane %v170, 2
    %v172 = vmax.f32 %v170, %v171
    %v173 = vrot.slane %v172, 1
    %v174 = vmax.f32 %v172, %v173
    %v175 = vsel %vm125, %v120, -inf
    %v176 = vrot.slane %v175, 4
    %v177 = vmax.f32 %v175, %v176
    %v178 = vrot.slane %v177, 2
    %v179 = vmax.f32 %v177, %v178
    %v180 = vrot.slane %v179, 1
    %v181 = vmax.f32 %v179, %v180
    %v182 = vld [vmem:[%s4] sm:$0x1]
    %v184 = vperm.slane %v182, 0
    %v186 = vmul.f32 %v132, %v184
    %v187 = vmul.f32 %v139, %v184
    %v188 = vmul.f32 %v146, %v184
    %v189 = vmul.f32 %v153, %v184
    %v190 = vmul.f32 %v160, %v184
    %v191 = vmul.f32 %v167, %v184
    %v192 = vmul.f32 %v174, %v184
    %v193 = vmul.f32 %v181, %v184
    %v202 = vrot.slane %v187, 7
    %vm203 = vcmask 1041409
    %v204 = vsel %vm203, %v202, %v186
    %v205 = vrot.slane %v188, 6
    %vm206 = vcmask 1042434
    %v207 = vsel %vm206, %v205, %v204
    %v208 = vrot.slane %v189, 5
    %vm209 = vcmask 1043459
    %v210 = vsel %vm209, %v208, %v207
    %v211 = vrot.slane %v190, 4
    %vm212 = vcmask 1044484
    %v213 = vsel %vm212, %v211, %v210
    %v214 = vrot.slane %v191, 3
    %vm215 = vcmask 1045509
    %v216 = vsel %vm215, %v214, %v213
    %v217 = vrot.slane %v192, 2
    %vm218 = vcmask 1046534
    %v219 = vsel %vm218, %v217, %v216
    %v220 = vrot.slane %v193, 1
    %vm221 = vcmask 1047559
    %v222 = vsel %vm221, %v220, %v219
    %vm224 = vcmask 130048
    %v225 = vsel %vm224, %v222, 0.0
    %226 = vadd.xlane.f32.xlu0 %v225
    %v227 = vpop.xlane.xlu0 %226
    %228 = vxpose.xlu0.b32.start [1/16] %v227, 128
    %229 = vxpose.xlu0.b32.cont [2/16] 0.0, 128
    %230 = vxpose.xlu0.b32.cont [3/16] 0.0, 128
    %231 = vxpose.xlu0.b32.cont [4/16] 0.0, 128
    %232 = vxpose.xlu0.b32.cont [5/16] 0.0, 128
    %233 = vxpose.xlu0.b32.cont [6/16] 0.0, 128
    %234 = vxpose.xlu0.b32.cont [7/16] 0.0, 128
    %235 = vxpose.xlu0.b32.cont [8/16] 0.0, 128
    %236 = vxpose.xlu0.b32.cont [9/16] 0.0, 128
    %237 = vxpose.xlu0.b32.cont [10/16] 0.0, 128
    %238 = vxpose.xlu0.b32.cont [11/16] 0.0, 128
    %239 = vxpose.xlu0.b32.cont [12/16] 0.0, 128
    %240 = vxpose.xlu0.b32.cont [13/16] 0.0, 128
    %241 = vxpose.xlu0.b32.cont [14/16] 0.0, 128
    %242 = vxpose.xlu0.b32.cont [15/16] 0.0, 128
    %243 = vxpose.xlu0.b32.end [16/16] 0.0, 128
    %v244 = vpop.trf.xlu0
    %v245 = vpop.trf.xlu0
    %v246 = vpop.trf.xlu0
    %v247 = vpop.trf.xlu0
    %v248 = vpop.trf.xlu0
    %v249 = vpop.trf.xlu0
    %v250 = vpop.trf.xlu0
    %v251 = vpop.trf.xlu0
    %v252 = vpop.trf.xlu0
    %v253 = vpop.trf.xlu0
    %v254 = vpop.trf.xlu0
    %v255 = vpop.trf.xlu0
    %v256 = vpop.trf.xlu0
    %v257 = vpop.trf.xlu0
    %v258 = vpop.trf.xlu0
    %v259 = vpop.trf.xlu0
    %260 = vset.pattern.permute.xlu0 32
    %261 = vperm.xlu0 %260, %v102
    %v262 = vpop.permute.xlu0 %261
    %264 = vset.pattern.permute.xlu0 32
    %265 = vperm.xlu0 %264, %v105
    %v266 = vpop.permute.xlu0 %265
    %268 = vset.pattern.permute.xlu0 32
    %269 = vperm.xlu0 %268, %v108
    %v270 = vpop.permute.xlu0 %269
    %272 = vset.pattern.permute.xlu0 32
    %273 = vperm.xlu0 %272, %v111
    %v274 = vpop.permute.xlu0 %273
    %v276 = vperm.slane %v244, 0
    %v277 = vadd.f32 %v262, %v276
    %v278 = vadd.f32 %v266, %v276
    %v279 = vadd.f32 %v270, %v276
    %v280 = vadd.f32 %v274, %v276
    %v281 = vmax.f32 %v277, 0.0
    %v282 = vmax.f32 %v278, 0.0
    %v283 = vmax.f32 %v279, 0.0
    %v284 = vmax.f32 %v280, 0.0
    %v285 = vld [vmem:[%s3] sm:$0xff]
    %v286 = vld [vmem:[%s3 + $0x8] sm:$0xff]
    %v287 = vld [vmem:[%s3 + $0x10] sm:$0xff]
    %v288 = vld [vmem:[%s3 + $0x18] sm:$0xff]
    %v289 = vmul.f32 %v281, %v285
    %v290 = vmul.f32 %v282, %v286
    %v291 = vmul.f32 %v283, %v287
    %v292 = vmul.f32 %v284, %v288
    %v301 = vsel %vm203, %v139, %v132
    %v302 = vsel %vm206, %v146, %v301
    %v303 = vsel %vm209, %v153, %v302
    %v304 = vsel %vm212, %v160, %v303
    %v305 = vsel %vm215, %v167, %v304
    %v306 = vsel %vm218, %v174, %v305
    %v307 = vsel %vm221, %v181, %v306
    %308 = vrot.lane.b32.xlu0 %v307, 112
    %v309 = vpop.permute.xlu0 %308
    %vm311 = vcmask 64512
    %v313 = vsel %vm311, %v289, 0
    %v316 = vsel %vm311, %v290, 0
    %v319 = vsel %vm311, %v291, 0
    %v322 = vsel %vm311, %v292, 0
    %324 = vmatpush.msra.mxu0 0.0
    %325 = vmatpush.msra.mxu0 0.0
    %326 = vmatpush.msra.mxu0 0.0
    %327 = vmatpush.msra.mxu0 0.0
    %328 = vmatpush.msra.mxu0 0.0
    %329 = vmatpush.msra.mxu0 0.0
    %330 = vmatpush.msra.mxu0 0.0
    %331 = vmatpush.msra.mxu0 0.0
    %332 = vmatpush.msra.mxu0 0.0
    %333 = vmatpush.msra.mxu0 0.0
    %334 = vmatpush.msra.mxu0 0.0
    %335 = vmatpush.msra.mxu0 0.0
    %336 = vmatpush.msra.mxu0 0.0
    %337 = vmatpush.msra.mxu0 0.0
    %338 = vmatpush.msra.mxu0 0.0
    %339 = vmatpush.msra.mxu0 %v309
    %340 = vmatmul.f32.gmra.mxu0 %v313
    %v341 = vpop.f32.mrf.mxu0
    %v342 = vadd.f32 0.0, %v341
    %343 = vmatmul.f32.gmra.mxu0 %v316
    %v344 = vpop.f32.mrf.mxu0
    %v345 = vadd.f32 0.0, %v344
    %346 = vmatmul.f32.gmra.mxu0 %v319
    %v347 = vpop.f32.mrf.mxu0
    %v348 = vadd.f32 0.0, %v347
    %349 = vmatmul.f32.gmra.mxu0 %v322
    %v350 = vpop.f32.mrf.mxu0
    %v351 = vadd.f32 0.0, %v350
    %352 = vdwg.mxu0
    %v353 = vld [vmem:[#allocation5] sm:$0xff]
    %v354 = vld [vmem:[#allocation5 + $0x8] sm:$0xff]
    %v355 = vld [vmem:[%s6] sm:$0x1]
    %v357 = vperm.slane %v355, 0
    %v360 = vsel %vm224, %v342, 0
    %v363 = vsel %vm224, %v345, 0
    %v366 = vsel %vm224, %v348, 0
    %v369 = vsel %vm224, %v351, 0
    %371 = vmatpush.msra.mxu0 0.0
    %372 = vmatpush.msra.mxu0 0.0
    %373 = vmatpush.msra.mxu0 0.0
    %374 = vmatpush.msra.mxu0 0.0
    %375 = vmatpush.msra.mxu0 0.0
    %376 = vmatpush.msra.mxu0 0.0
    %377 = vmatpush.msra.mxu0 0.0
    %378 = vmatpush.msra.mxu0 0.0
    %379 = vmatpush.msra.mxu0 0.0
    %380 = vmatpush.msra.mxu0 0.0
    %381 = vmatpush.msra.mxu0 0.0
    %382 = vmatpush.msra.mxu0 0.0
    %383 = vmatpush.msra.mxu0 0.0
    %384 = vmatpush.msra.mxu0 0.0
    %385 = vmatpush.msra.mxu0 %v354
    %386 = vmatpush.msra.mxu0 %v353
    %387 = vmatmul.f32.gmra.mxu0 %v360
    %v388 = vpop.f32.mrf.mxu0
    %v389 = vadd.f32 %v357, %v388
    %390 = vmatmul.f32.gmra.mxu0 %v363
    %v391 = vpop.f32.mrf.mxu0
    %v392 = vadd.f32 %v357, %v391
    %393 = vmatmul.f32.gmra.mxu0 %v366
    %v394 = vpop.f32.mrf.mxu0
    %v395 = vadd.f32 %v357, %v394
    %396 = vmatmul.f32.gmra.mxu0 %v369
    %v397 = vpop.f32.mrf.mxu0
    %v398 = vadd.f32 %v357, %v397
    %399 = vdwg.mxu0
    %v400 = vadd.f32 %v389, %v59
    %v401 = vadd.f32 %v392, %v60
    %v402 = vadd.f32 %v395, %v61
    %v403 = vadd.f32 %v398, %v62
    %404 = vst.msk [vmem:[#allocation7] sm:$0xff] %vm71, %v400
    %405 = vst.msk [vmem:[#allocation7 + $0x8] sm:$0xff] %vm71, %v401
    %406 = vst.msk [vmem:[#allocation7 + $0x10] sm:$0xff] %vm71, %v402
    %407 = vst.msk [vmem:[#allocation7 + $0x18] sm:$0xff] %vm71, %v403
    // Predicated region
    $region38: #{tpu_custom_call.1} parent=1 // pred_check
      _
    $region39: #{tpu_custom_call.1} parent=1 // pred_check_branch
      %409 = sbr.rel (0) target = $region41
    $region40: #{tpu_custom_call.1} parent=1 // pred_region
      %411 = vsyncadd [#allocation4], 0
      %s412 = sshll.u32 [#allocation7], 4
      %s413 = int_to_ptr.vmem [resolvable:$true] %s412
      %s414 = sshll.u32 %s7, 4
      %s415 = int_to_ptr.hbm [resolvable:$true] %s414
      %420 = dma.vmem_to_hbm [thread:$0]  %s413, 512, %s415, [#allocation4], 128, 128, 8
    $region41: #{tpu_custom_call.1} parent=1 // pred_fallthru
      _
    // Predicated region
    $region42: #{tpu_custom_call.1} parent=1 // pred_check
      _
    $region43: #{tpu_custom_call.1} parent=1 // pred_check_branch
      %422 = sbr.rel (0) target = $region45
    $region44: #{tpu_custom_call.1} parent=1 // pred_region
      %424 = dma.done [#allocation4], 512
    $region45: #{tpu_custom_call.1} parent=1 // pred_fallthru
      _
    %425 = vsyncpa [#allocation3], 1
    %426 = vsyncpa [#allocation6], 1
    %427 = vsyncpa [#allocation4], 1

</llo_original>
